<compile_context>
chip_gen: v7x
topology: tpu7x:2x2x1
jax: 0.10.0
libtpu: 0.0.40
codegen_flags: <defaults>
</compile_context>

<pallas_src>
import jax
import jax.numpy as jnp
from jax.experimental import pallas as pl
from jax.experimental.pallas import tpu as pltpu

PAD_N = 128  # padded lane width for logits / gates (one full vreg of lanes)


# -----------------------------------------------------------------------------
# Kernel
# -----------------------------------------------------------------------------
def _make_kernel(in_size, hidden):
    IN, H = in_size, hidden

    def kernel(acts_ref, w_ref, b_ref, out_ref):
        # ---- unpack activations from the single (B, PAD_N + 4H) slab ----
        x = acts_ref[:, 0:IN]
        h0 = acts_ref[:, PAD_N + 0 * H:PAD_N + 1 * H]
        c0 = acts_ref[:, PAD_N + 1 * H:PAD_N + 2 * H]
        h1 = acts_ref[:, PAD_N + 2 * H:PAD_N + 3 * H]
        c1 = acts_ref[:, PAD_N + 3 * H:PAD_N + 4 * H]

        # ---- static row views into the single weight slab (all 8-aligned) ----
        r = 0
        w_ih1 = w_ref[r:r + IN, :]; r += IN
        w_hh1 = w_ref[r:r + H, :];  r += H
        w_ih2 = w_ref[r:r + H, :];  r += H
        w_hh2 = w_ref[r:r + H, :];  r += H
        w_out = w_ref[r:r + H, :]

        b = b_ref[...]                      # (3, PAD_N)
        b1, b2, b_out = b[0:1, :], b[1:2, :], b[2:3, :]

        # ---- layer-1 LSTMCell: two accumulating matmuls, no lane concat ----
        g1 = (jnp.dot(x, w_ih1, preferred_element_type=jnp.float32)
              + jnp.dot(h0, w_hh1, preferred_element_type=jnp.float32)
              + b1)
        i1 = jax.nn.sigmoid(g1[:, 0 * H:1 * H])
        f1 = jax.nn.sigmoid(g1[:, 1 * H:2 * H])
        gg1 = jnp.tanh(g1[:, 2 * H:3 * H])
        o1 = jax.nn.sigmoid(g1[:, 3 * H:4 * H])
        c1n = f1 * c0 + i1 * gg1
        h1n = o1 * jnp.tanh(c1n)

        # ---- layer-2 LSTMCell ----
        g2 = (jnp.dot(h1n, w_ih2, preferred_element_type=jnp.float32)
              + jnp.dot(h1, w_hh2, preferred_element_type=jnp.float32)
              + b2)
        i2 = jax.nn.sigmoid(g2[:, 0 * H:1 * H])
        f2 = jax.nn.sigmoid(g2[:, 1 * H:2 * H])
        gg2 = jnp.tanh(g2[:, 2 * H:3 * H])
        o2 = jax.nn.sigmoid(g2[:, 3 * H:4 * H])
        c2n = f2 * c1 + i2 * gg2
        h2n = o2 * jnp.tanh(c2n)

        # ---- Linear head, padded to a full 128-lane block ----
        logits_pad = (jnp.dot(h2n, w_out, preferred_element_type=jnp.float32)
                      + b_out)                               # (B, PAD_N)

        # ---- stores split at the 128-lane vreg boundary ----
        out_ref[:, 0:PAD_N] = logits_pad.astype(out_ref.dtype)   # unmasked vst
        states = jnp.concatenate([h1n, c1n, h2n, c2n], axis=-1)  # (B, 4H), 1 vreg
        out_ref[:, PAD_N:PAD_N + 4 * H] = states.astype(out_ref.dtype)

    return kernel


def _step_packed(acts, w_slab, b_slab, in_size, hidden):
    """One fused forward step on packed operands. Returns the (B, 256) slab."""
    B = acts.shape[0]
    vmem = pl.BlockSpec(memory_space=pltpu.MemorySpace.VMEM)
    return pl.pallas_call(
        _make_kernel(in_size, hidden),
        out_shape=jax.ShapeDtypeStruct((B, PAD_N + 4 * hidden), jnp.float32),
        in_specs=[vmem, vmem, vmem],
        out_specs=vmem,
    )(acts, w_slab, b_slab)


# -----------------------------------------------------------------------------
# Wrapper-side packing helpers
# -----------------------------------------------------------------------------
def pack_acts(x_in, h0, c0, h1, c1):
    """Pack the five activation inputs into one (B, 256) lane-dense slab."""
    IN = x_in.shape[1]
    x_pad = jnp.pad(x_in, ((0, 0), (0, PAD_N - IN)))
    return jnp.concatenate([x_pad, h0, c0, h1, c1], axis=-1)


def pack_acts_from_slab(x_new, prev_slab):
    """Chain step: reuse the previous output slab's packed state half directly
    (h0<-h1n, c0<-c1n, h1<-h2n, c1<-c2n — same lane layout, no re-packing)."""
    IN = x_new.shape[1]
    x_pad = jnp.pad(x_new, ((0, 0), (0, PAD_N - IN)))
    return jnp.concatenate([x_pad, prev_slab[:, PAD_N:]], axis=-1)


def unpack_slab(slab, num_classes, H):
    out = slab[:, :num_classes]
    h1n = slab[:, PAD_N + 0 * H:PAD_N + 1 * H]
    c1n = slab[:, PAD_N + 1 * H:PAD_N + 2 * H]
    h2n = slab[:, PAD_N + 2 * H:PAD_N + 3 * H]
    c2n = slab[:, PAD_N + 3 * H:PAD_N + 4 * H]
    return out, h1n, c1n, h2n, c2n


def wifi_lstm_forward(x_in, h0, c0, h1, c1, packed, num_classes):
    """Run the fused kernel; returns (out, h1n, c1n, h2n, c2n)."""
    IN = x_in.shape[1]
    H = h0.shape[1]
    acts = pack_acts(x_in, h0, c0, h1, c1)
    slab = _step_packed(acts, packed["w_slab"], packed["b_slab"], IN, H)
    return unpack_slab(slab, num_classes, H)


# -----------------------------------------------------------------------------
# Parameters
# -----------------------------------------------------------------------------
def init_params(key, input_size, hidden_size, num_classes):
    """PyTorch-style uniform(-1/sqrt(H), 1/sqrt(H)) init, deterministic."""
    bound = 1.0 / (hidden_size ** 0.5)
    keys = jax.random.split(key, 12)
    u = lambda k, shape: jax.random.uniform(k, shape, jnp.float32, -bound, bound)

    # nn.LSTMCell weights are (4H, in_feat); store transposed (in_feat, 4H).
    w_ih1 = u(keys[0], (input_size, 4 * hidden_size))
    w_hh1 = u(keys[1], (hidden_size, 4 * hidden_size))
    b_ih1 = u(keys[2], (4 * hidden_size,))
    b_hh1 = u(keys[3], (4 * hidden_size,))

    w_ih2 = u(keys[4], (hidden_size, 4 * hidden_size))
    w_hh2 = u(keys[5], (hidden_size, 4 * hidden_size))
    b_ih2 = u(keys[6], (4 * hidden_size,))
    b_hh2 = u(keys[7], (4 * hidden_size,))

    # nn.Linear weight is (num_classes, H); store transposed (H, num_classes).
    w_out = u(keys[8], (hidden_size, num_classes))
    b_out = u(keys[9], (num_classes,))

    return {
        "w_ih1": w_ih1, "w_hh1": w_hh1, "b1": (b_ih1 + b_hh1)[None, :],
        "w_ih2": w_ih2, "w_hh2": w_hh2, "b2": (b_ih2 + b_hh2)[None, :],
        "w_out": w_out, "b_out": b_out[None, :],
    }


def pack_params(p, input_size, hidden_size, num_classes):
    """Pack all weights into one (rows, 128) slab and biases into (3, 128)."""
    H = hidden_size
    assert 4 * H == PAD_N, "kernel packing assumes 4*hidden == 128"
    assert num_classes <= PAD_N
    pad_cols = PAD_N - num_classes
    w_out_pad = jnp.pad(p["w_out"], ((0, 0), (0, pad_cols)))   # (H, 128)
    b_out_pad = jnp.pad(p["b_out"], ((0, 0), (0, pad_cols)))   # (1, 128)

    w_slab = jnp.concatenate(
        [p["w_ih1"], p["w_hh1"], p["w_ih2"], p["w_hh2"], w_out_pad], axis=0)
    pad_rows = (-w_slab.shape[0]) % 8                          # sublane-align
    if pad_rows:
        w_slab = jnp.pad(w_slab, ((0, pad_rows), (0, 0)))

    b_slab = jnp.concatenate([p["b1"], p["b2"], b_out_pad], axis=0)  # (3, 128)
    return {"w_slab": w_slab, "b_slab": b_slab}


# -----------------------------------------------------------------------------
# Pure-JAX reference (unfused, PyTorch-equivalent math)
# -----------------------------------------------------------------------------
def reference_forward(x_in, h0, c0, h1, c1, p):
    def cell(x, h, c, w_ih, w_hh, b, H):
        g = x @ w_ih + h @ w_hh + b
        i = jax.nn.sigmoid(g[:, :H])
        f = jax.nn.sigmoid(g[:, H:2 * H])
        gg = jnp.tanh(g[:, 2 * H:3 * H])
        o = jax.nn.sigmoid(g[:, 3 * H:])
        c_n = f * c + i * gg
        return o * jnp.tanh(c_n), c_n

    H = h0.shape[1]
    h1n, c1n = cell(x_in, h0, c0, p["w_ih1"], p["w_hh1"], p["b1"], H)
    h2n, c2n = cell(h1n, h1, c1, p["w_ih2"], p["w_hh2"], p["b2"], H)
    out = h2n @ p["w_out"] + p["b_out"]
    return out, h1n, c1n, h2n, c2n


# -----------------------------------------------------------------------------
if __name__ == "__main__":
    B = 2
    INPUT_SIZE = 16
    HIDDEN = 32
    NUM_CLASSES = 8

    key = jax.random.PRNGKey(0)
    k_x, k_h0, k_c0, k_h1, k_c1, k_p, k_x2 = jax.random.split(key, 7)

    x_in = jax.random.normal(k_x, (B, INPUT_SIZE), jnp.float32)
    h0 = jax.random.normal(k_h0, (B, HIDDEN), jnp.float32)
    c0 = jax.random.normal(k_c0, (B, HIDDEN), jnp.float32)
    h1 = jax.random.normal(k_h1, (B, HIDDEN), jnp.float32)
    c1 = jax.random.normal(k_c1, (B, HIDDEN), jnp.float32)

    params = init_params(k_p, INPUT_SIZE, HIDDEN, NUM_CLASSES)
    packed = pack_params(params, INPUT_SIZE, HIDDEN, NUM_CLASSES)

    # ---- step 1: fused kernel vs. reference ----
    outs = wifi_lstm_forward(x_in, h0, c0, h1, c1, packed, NUM_CLASSES)
    outs = jax.block_until_ready(outs)
    refs = reference_forward(x_in, h0, c0, h1, c1, params)
    for got, want in zip(outs, refs):
        assert jnp.allclose(got, want, atol=1e-5, rtol=1e-5), "mismatch (step 1)"

    # ---- step 2: chain via the packed state half of the output slab ----
    x2 = jax.random.normal(k_x2, (B, INPUT_SIZE), jnp.float32)
    slab1 = _step_packed(pack_acts(x_in, h0, c0, h1, c1),
                         packed["w_slab"], packed["b_slab"], INPUT_SIZE, HIDDEN)
    slab2 = _step_packed(pack_acts_from_slab(x2, slab1),
                         packed["w_slab"], packed["b_slab"], INPUT_SIZE, HIDDEN)
    outs2 = jax.block_until_ready(unpack_slab(slab2, NUM_CLASSES, HIDDEN))
    _, r_h1n, r_c1n, r_h2n, r_c2n = refs
    refs2 = reference_forward(x2, r_h1n, r_c1n, r_h2n, r_c2n, params)
    for got, want in zip(outs2, refs2):
        assert jnp.allclose(got, want, atol=1e-5, rtol=1e-5), "mismatch (step 2)"

    print("KERNEL_OK")
</pallas_src>

<mosaic_0001>
module attributes {stable_mosaic.version = 11 : i64} {
  func.func @kernel(%arg0: memref<2x256xf32, #tpu.memory_space<vmem>>, %arg1: memref<144x128xf32, #tpu.memory_space<vmem>>, %arg2: memref<3x128xf32, #tpu.memory_space<vmem>>, %arg3: memref<2x256xf32, #tpu.memory_space<vmem>>) attributes {dimension_semantics = [], scalar_prefetch = 0 : i64, scratch_operands = 0 : i64, tpu.core_type = #tpu.core_type<tc>} {
    %c0 = arith.constant 0 : index
    %c0_0 = arith.constant 0 : index
    %0 = vector.load %arg0[%c0, %c0_0] : memref<2x256xf32, #tpu.memory_space<vmem>>, vector<2x16xf32>
    %c0_1 = arith.constant 0 : index
    %c128 = arith.constant 128 : index
    %1 = vector.load %arg0[%c0_1, %c128] : memref<2x256xf32, #tpu.memory_space<vmem>>, vector<2x32xf32>
    %c0_2 = arith.constant 0 : index
    %c160 = arith.constant 160 : index
    %2 = vector.load %arg0[%c0_2, %c160] : memref<2x256xf32, #tpu.memory_space<vmem>>, vector<2x32xf32>
    %c0_3 = arith.constant 0 : index
    %c192 = arith.constant 192 : index
    %3 = vector.load %arg0[%c0_3, %c192] : memref<2x256xf32, #tpu.memory_space<vmem>>, vector<2x32xf32>
    %c0_4 = arith.constant 0 : index
    %c224 = arith.constant 224 : index
    %4 = vector.load %arg0[%c0_4, %c224] : memref<2x256xf32, #tpu.memory_space<vmem>>, vector<2x32xf32>
    %c0_5 = arith.constant 0 : index
    %c0_6 = arith.constant 0 : index
    %5 = vector.load %arg1[%c0_5, %c0_6] : memref<144x128xf32, #tpu.memory_space<vmem>>, vector<16x128xf32>
    %c16 = arith.constant 16 : index
    %c0_7 = arith.constant 0 : index
    %6 = vector.load %arg1[%c16, %c0_7] : memref<144x128xf32, #tpu.memory_space<vmem>>, vector<32x128xf32>
    %c48 = arith.constant 48 : index
    %c0_8 = arith.constant 0 : index
    %7 = vector.load %arg1[%c48, %c0_8] : memref<144x128xf32, #tpu.memory_space<vmem>>, vector<32x128xf32>
    %c80 = arith.constant 80 : index
    %c0_9 = arith.constant 0 : index
    %8 = vector.load %arg1[%c80, %c0_9] : memref<144x128xf32, #tpu.memory_space<vmem>>, vector<32x128xf32>
    %c112 = arith.constant 112 : index
    %c0_10 = arith.constant 0 : index
    %9 = vector.load %arg1[%c112, %c0_10] : memref<144x128xf32, #tpu.memory_space<vmem>>, vector<32x128xf32>
    %c0_11 = arith.constant 0 : index
    %c0_12 = arith.constant 0 : index
    %10 = vector.load %arg2[%c0_11, %c0_12] : memref<3x128xf32, #tpu.memory_space<vmem>>, vector<3x128xf32>
    %11 = vector.extract_strided_slice %10 {offsets = [0, 0], sizes = [1, 128], strides = [1, 1]} : vector<3x128xf32> to vector<1x128xf32>
    %12 = vector.extract_strided_slice %10 {offsets = [1, 0], sizes = [1, 128], strides = [1, 1]} : vector<3x128xf32> to vector<1x128xf32>
    %13 = vector.extract_strided_slice %10 {offsets = [2, 0], sizes = [1, 128], strides = [1, 1]} : vector<3x128xf32> to vector<1x128xf32>
    %cst = arith.constant dense<0.000000e+00> : vector<2x128xf32>
    %14 = tpu.matmul %0, %5, %cst {dimension_numbers = #tpu.dot_dimension_numbers<[1], [0], [0], [1], [0, 0, 1, 1], [], []>} : vector<2x16xf32>, vector<16x128xf32>, vector<2x128xf32> -> vector<2x128xf32>
    %cst_13 = arith.constant dense<0.000000e+00> : vector<2x128xf32>
    %15 = tpu.matmul %1, %6, %cst_13 {dimension_numbers = #tpu.dot_dimension_numbers<[1], [0], [0], [1], [0, 0, 1, 1], [], []>} : vector<2x32xf32>, vector<32x128xf32>, vector<2x128xf32> -> vector<2x128xf32>
    %16 = arith.addf %14, %15 : vector<2x128xf32>
    %17 = vector.broadcast %11 : vector<1x128xf32> to vector<2x128xf32>
    %18 = arith.addf %16, %17 : vector<2x128xf32>
    %19 = vector.extract_strided_slice %18 {offsets = [0, 0], sizes = [2, 32], strides = [1, 1]} : vector<2x128xf32> to vector<2x32xf32>
    %20 = arith.negf %19 : vector<2x32xf32>
    %21 = math.exp %20 : vector<2x32xf32>
    %cst_14 = arith.constant 1.000000e+00 : f32
    %22 = vector.broadcast %cst_14 : f32 to vector<2x32xf32>
    %23 = arith.addf %22, %21 : vector<2x32xf32>
    %24 = arith.divf %22, %23 : vector<2x32xf32>
    %25 = vector.extract_strided_slice %18 {offsets = [0, 32], sizes = [2, 32], strides = [1, 1]} : vector<2x128xf32> to vector<2x32xf32>
    %26 = arith.negf %25 : vector<2x32xf32>
    %27 = math.exp %26 : vector<2x32xf32>
    %cst_15 = arith.constant 1.000000e+00 : f32
    %28 = vector.broadcast %cst_15 : f32 to vector<2x32xf32>
    %29 = arith.addf %28, %27 : vector<2x32xf32>
    %30 = arith.divf %28, %29 : vector<2x32xf32>
    %31 = vector.extract_strided_slice %18 {offsets = [0, 64], sizes = [2, 32], strides = [1, 1]} : vector<2x128xf32> to vector<2x32xf32>
    %32 = math.tanh %31 : vector<2x32xf32>
    %33 = vector.extract_strided_slice %18 {offsets = [0, 96], sizes = [2, 32], strides = [1, 1]} : vector<2x128xf32> to vector<2x32xf32>
    %34 = arith.negf %33 : vector<2x32xf32>
    %35 = math.exp %34 : vector<2x32xf32>
    %cst_16 = arith.constant 1.000000e+00 : f32
    %36 = vector.broadcast %cst_16 : f32 to vector<2x32xf32>
    %37 = arith.addf %36, %35 : vector<2x32xf32>
    %38 = arith.divf %36, %37 : vector<2x32xf32>
    %39 = arith.mulf %30, %2 : vector<2x32xf32>
    %40 = arith.mulf %24, %32 : vector<2x32xf32>
    %41 = arith.addf %39, %40 : vector<2x32xf32>
    %42 = math.tanh %41 : vector<2x32xf32>
    %43 = arith.mulf %38, %42 : vector<2x32xf32>
    %cst_17 = arith.constant dense<0.000000e+00> : vector<2x128xf32>
    %44 = tpu.matmul %43, %7, %cst_17 {dimension_numbers = #tpu.dot_dimension_numbers<[1], [0], [0], [1], [0, 0, 1, 1], [], []>} : vector<2x32xf32>, vector<32x128xf32>, vector<2x128xf32> -> vector<2x128xf32>
    %cst_18 = arith.constant dense<0.000000e+00> : vector<2x128xf32>
    %45 = tpu.matmul %3, %8, %cst_18 {dimension_numbers = #tpu.dot_dimension_numbers<[1], [0], [0], [1], [0, 0, 1, 1], [], []>} : vector<2x32xf32>, vector<32x128xf32>, vector<2x128xf32> -> vector<2x128xf32>
    %46 = arith.addf %44, %45 : vector<2x128xf32>
    %47 = vector.broadcast %12 : vector<1x128xf32> to vector<2x128xf32>
    %48 = arith.addf %46, %47 : vector<2x128xf32>
    %49 = vector.extract_strided_slice %48 {offsets = [0, 0], sizes = [2, 32], strides = [1, 1]} : vector<2x128xf32> to vector<2x32xf32>
    %50 = arith.negf %49 : vector<2x32xf32>
    %51 = math.exp %50 : vector<2x32xf32>
    %cst_19 = arith.constant 1.000000e+00 : f32
    %52 = vector.broadcast %cst_19 : f32 to vector<2x32xf32>
    %53 = arith.addf %52, %51 : vector<2x32xf32>
    %54 = arith.divf %52, %53 : vector<2x32xf32>
    %55 = vector.extract_strided_slice %48 {offsets = [0, 32], sizes = [2, 32], strides = [1, 1]} : vector<2x128xf32> to vector<2x32xf32>
    %56 = arith.negf %55 : vector<2x32xf32>
    %57 = math.exp %56 : vector<2x32xf32>
    %cst_20 = arith.constant 1.000000e+00 : f32
    %58 = vector.broadcast %cst_20 : f32 to vector<2x32xf32>
    %59 = arith.addf %58, %57 : vector<2x32xf32>
    %60 = arith.divf %58, %59 : vector<2x32xf32>
    %61 = vector.extract_strided_slice %48 {offsets = [0, 64], sizes = [2, 32], strides = [1, 1]} : vector<2x128xf32> to vector<2x32xf32>
    %62 = math.tanh %61 : vector<2x32xf32>
    %63 = vector.extract_strided_slice %48 {offsets = [0, 96], sizes = [2, 32], strides = [1, 1]} : vector<2x128xf32> to vector<2x32xf32>
    %64 = arith.negf %63 : vector<2x32xf32>
    %65 = math.exp %64 : vector<2x32xf32>
    %cst_21 = arith.constant 1.000000e+00 : f32
    %66 = vector.broadcast %cst_21 : f32 to vector<2x32xf32>
    %67 = arith.addf %66, %65 : vector<2x32xf32>
    %68 = arith.divf %66, %67 : vector<2x32xf32>
    %69 = arith.mulf %60, %4 : vector<2x32xf32>
    %70 = arith.mulf %54, %62 : vector<2x32xf32>
    %71 = arith.addf %69, %70 : vector<2x32xf32>
    %72 = math.tanh %71 : vector<2x32xf32>
    %73 = arith.mulf %68, %72 : vector<2x32xf32>
    %cst_22 = arith.constant dense<0.000000e+00> : vector<2x128xf32>
    %74 = tpu.matmul %73, %9, %cst_22 {dimension_numbers = #tpu.dot_dimension_numbers<[1], [0], [0], [1], [0, 0, 1, 1], [], []>} : vector<2x32xf32>, vector<32x128xf32>, vector<2x128xf32> -> vector<2x128xf32>
    %75 = vector.broadcast %13 : vector<1x128xf32> to vector<2x128xf32>
    %76 = arith.addf %74, %75 : vector<2x128xf32>
    %c0_23 = arith.constant 0 : index
    %c0_24 = arith.constant 0 : index
    %77 = vector.load %arg3[%c0_23, %c0_24] : memref<2x256xf32, #tpu.memory_space<vmem>>, vector<2x128xf32>
    tpu.vector_store %arg3[%c0_23, %c0_24], %76 {strides = array<i32>} : memref<2x256xf32, #tpu.memory_space<vmem>>, vector<2x128xf32>,
    %78 = tpu.concatenate %43, %41, %73, %71 in 1 : vector<2x32xf32>, vector<2x32xf32>, vector<2x32xf32>, vector<2x32xf32> -> vector<2x128xf32>
    %c0_25 = arith.constant 0 : index
    %c128_26 = arith.constant 128 : index
    %79 = vector.load %arg3[%c0_25, %c128_26] : memref<2x256xf32, #tpu.memory_space<vmem>>, vector<2x128xf32>
    tpu.vector_store %arg3[%c0_25, %c128_26], %78 {strides = array<i32>} : memref<2x256xf32, #tpu.memory_space<vmem>>, vector<2x128xf32>,
    return
  }
}

</mosaic_0001>

<llo_original>
// kernel: tpu_custom_call.1
$region0: #{tpu_custom_call.1}
  #allocation0 [shape = 'u32[]', space=smem, size = 0x4, offset = 0x4, fixed_abs, tag = 'smem constant byte address 0x4 - core index']
  #allocation1 [shape = 'u32[144,128]{1,0:T(1,128)}', space=vmem, size = 0x12000, scoped, tag = 'internal scratch']
  %s0 = inlined_call_operand.hbm [shape: f32[2,256], index: 0, kind: input, shape index: {}]
  %s1 = inlined_call_operand.hbm [shape: f32[144,128], index: 1, kind: input, shape index: {}]
  %s2 = inlined_call_operand.vmem [shape: f32[3,128], index: 2, kind: input, shape index: {}]
  %s3 = inlined_call_operand.hbm [shape: f32[2,256], index: 3, kind: output, shape index: {}]
  %s4 = sld [smem:[#allocation0]]
  $region30: #{tpu_custom_call.1} parent=0
    _
  %s6 = ssub.s32 1, %s4
  %s7 = scalar_select 0, %s6, %s4
  $region1: #{tpu_custom_call.1} parent=0
    #allocation2 [shape = 'u8[2048]{0}', space=vmem, size = 0x800, scoped, tag = 'input window, operand 0, single buffered']
    #allocation3 [shape = 's32[1]{0}', space=sflag, size = 0x4, scoped, tag = 'scoped memory for tpu_custom_call.1']
    #allocation4 [shape = 's32[1]{0}', space=sflag, size = 0x4, scoped, tag = 'scoped memory for tpu_custom_call.1']
    #allocation5 [shape = 'u8[73728]{0}', space=vmem, size = 0x12000, scoped, tag = 'input window, operand 1, single buffered']
    #allocation6 [shape = 's32[1]{0}', space=sflag, size = 0x4, scoped, tag = 'scoped memory for tpu_custom_call.1']
    #allocation7 [shape = 'u8[2048]{0}', space=vmem, size = 0x800, scoped, tag = 'output window, operand 0, single buffered']
    %8 = vsyncpa [#allocation3], 0
    %9 = vsyncpa [#allocation6], 0
    %10 = vsyncpa [#allocation4], 0
    // Predicated region
    $region2: #{tpu_custom_call.1} parent=1 // pred_check
      _
    $region3: #{tpu_custom_call.1} parent=1 // pred_check_branch
      %12 = sbr.rel (0) target = $region5
    $region4: #{tpu_custom_call.1} parent=1 // pred_region
      %s14 = ssub.s32 64, 64
      %15 = vsyncadd [#allocation3], %s14
      %s17 = sshll.u32 [#allocation2], 4
      %s18 = int_to_ptr.vmem [resolvable:$true] %s17
      %20 = dma.hbm_to_vmem [thread:$0]  %s0, 64, %s18, [#allocation3]
    $region5: #{tpu_custom_call.1} parent=1 // pred_fallthru
      _
    // Predicated region
    $region6: #{tpu_custom_call.1} parent=1 // pred_check
      _
    $region7: #{tpu_custom_call.1} parent=1 // pred_check_branch
      %22 = sbr.rel (0) target = $region9
    $region8: #{tpu_custom_call.1} parent=1 // pred_region
      %s24 = ssub.s32 2304, 2304
      %25 = vsyncadd [#allocation6], %s24
      %s26 = sshll.u32 [#allocation5], 4
      %s27 = int_to_ptr.vmem [resolvable:$true] %s26
      %32 = dma.hbm_to_vmem [thread:$0]  %s1, 2304, %s27, [#allocation6], 128, 128, 8
    $region9: #{tpu_custom_call.1} parent=1 // pred_fallthru
      _
    // Predicated region
    $region10: #{tpu_custom_call.1} parent=1 // pred_check
      _
    $region11: #{tpu_custom_call.1} parent=1 // pred_check_branch
      %34 = sbr.rel (0) target = $region13
    $region12: #{tpu_custom_call.1} parent=1 // pred_region
      _
    $region13: #{tpu_custom_call.1} parent=1 // pred_fallthru
      _
    // Predicated region
    $region14: #{tpu_custom_call.1} parent=1 // pred_check
      _
    $region15: #{tpu_custom_call.1} parent=1 // pred_check_branch
      %36 = sbr.rel (0) target = $region17
    $region16: #{tpu_custom_call.1} parent=1 // pred_region
      %37 = dma.done [#allocation3], 64
    $region17: #{tpu_custom_call.1} parent=1 // pred_fallthru
      _
    // Predicated region
    $region18: #{tpu_custom_call.1} parent=1 // pred_check
      _
    $region19: #{tpu_custom_call.1} parent=1 // pred_check_branch
      %39 = sbr.rel (0) target = $region21
    $region20: #{tpu_custom_call.1} parent=1 // pred_region
      %40 = dma.done [#allocation6], 2304
    $region21: #{tpu_custom_call.1} parent=1 // pred_fallthru
      _
    %v41 = vld [vmem:[#allocation2] sm:$0x3]
    %v42 = vld [vmem:[#allocation2 + $0x2] sm:$0x3]
    %v43 = vld [vmem:[#allocation5] sm:$0xff]
    %v44 = vld [vmem:[#allocation5 + $0x8] sm:$0xff]
    %v45 = vld [vmem:[#allocation5 + $0x10] sm:$0xff]
    %v46 = vld [vmem:[#allocation5 + $0x18] sm:$0xff]
    %v47 = vld [vmem:[#allocation5 + $0x20] sm:$0xff]
    %v48 = vld [vmem:[#allocation5 + $0x28] sm:$0xff]
    %v49 = vld [vmem:[#allocation5 + $0x30] sm:$0xff]
    %v50 = vld [vmem:[#allocation5 + $0x38] sm:$0xff]
    %v51 = vld [vmem:[#allocation5 + $0x40] sm:$0xff]
    %v52 = vld [vmem:[#allocation5 + $0x48] sm:$0xff]
    %v53 = vld [vmem:[#allocation5 + $0x50] sm:$0xff]
    %v54 = vld [vmem:[#allocation5 + $0x58] sm:$0xff]
    %v55 = vld [vmem:[#allocation5 + $0x60] sm:$0xff]
    %v56 = vld [vmem:[#allocation5 + $0x68] sm:$0xff]
    %v57 = vld [vmem:[#allocation5 + $0x70] sm:$0xff]
    %v58 = vld [vmem:[#allocation5 + $0x78] sm:$0xff]
    %v59 = vld [vmem:[#allocation5 + $0x80] sm:$0xff]
    %v60 = vld [vmem:[#allocation5 + $0x88] sm:$0xff]
    %v61 = vld [vmem:[%s2] sm:$0x7]
    %vm62 = vcmask 261120
    %v64 = vsel %vm62, %v42, 0
    %66 = vmatprep.subr.mxu0 0.0
    %67 = vmatpush1.msra.mxu0 %v45
    %68 = vmatprep.subr.mxu0 0.0
    %69 = vmatpush1.msra.mxu0 %v46
    %70 = vmatprep.subr.mxu0 0.0
    %71 = vmatpush1.msra.mxu0 %v47
    %72 = vmatprep.subr.mxu0 0.0
    %73 = vmatpush1.msra.mxu0 %v48
    %74 = vmatprep.subr.mxu0 0.0
    %75 = vmatpush1.msra.mxu0 0.0
    %76 = vmatprep.subr.mxu0 0.0
    %77 = vmatpush1.msra.mxu0 0.0
    %78 = vmatprep.subr.mxu0 0.0
    %79 = vmatpush1.msra.mxu0 0.0
    %80 = vmatprep.subr.mxu0 0.0
    %81 = vmatpush1.msra.mxu0 0.0
    %82 = vmatprep.subr.mxu0 0.0
    %83 = vmatpush1.msra.mxu0 0.0
    %84 = vmatprep.subr.mxu0 0.0
    %85 = vmatpush1.msra.mxu0 0.0
    %86 = vmatprep.subr.mxu0 0.0
    %87 = vmatpush1.msra.mxu0 0.0
    %88 = vmatprep.subr.mxu0 0.0
    %89 = vmatpush1.msra.mxu0 0.0
    %90 = vmatprep.subr.mxu0 0.0
    %91 = vmatpush1.msra.mxu0 0.0
    %92 = vmatprep.subr.mxu0 0.0
    %93 = vmatpush1.msra.mxu0 0.0
    %94 = vmatprep.subr.mxu0 0.0
    %95 = vmatpush1.msra.mxu0 0.0
    %96 = vmatprep.subr.mxu0 0.0
    %97 = vmatpush1.msra.mxu0 0.0
    %98 = vmatprep.subr.mxu0 0.0
    %99 = vmatpush1.msra.mxu0 0.0
    %100 = vmatprep.subr.mxu0 0.0
    %101 = vmatpush1.msra.mxu0 0.0
    %102 = vmatprep.subr.mxu0 0.0
    %103 = vmatpush1.msra.mxu0 0.0
    %104 = vmatprep.subr.mxu0 0.0
    %105 = vmatpush1.msra.mxu0 0.0
    %106 = vmatprep.subr.mxu0 0.0
    %107 = vmatpush1.msra.mxu0 0.0
    %108 = vmatprep.subr.mxu0 0.0
    %109 = vmatpush1.msra.mxu0 0.0
    %110 = vmatprep.subr.mxu0 0.0
    %111 = vmatpush1.msra.mxu0 0.0
    %112 = vmatprep.subr.mxu0 0.0
    %113 = vmatpush1.msra.mxu0 0.0
    %114 = vmatprep.subr.mxu0 0.0
    %115 = vmatpush1.msra.mxu0 0.0
    %116 = vmatprep.subr.mxu0 0.0
    %117 = vmatpush1.msra.mxu0 0.0
    %118 = vmatprep.subr.mxu0 0.0
    %119 = vmatpush1.msra.mxu0 0.0
    %120 = vmatprep.subr.mxu0 0.0
    %121 = vmatpush1.msra.mxu0 0.0
    %122 = vmatprep.subr.mxu0 0.0
    %123 = vmatpush1.msra.mxu0 0.0
    %124 = vmatprep.subr.mxu0 0.0
    %125 = vmatpush1.msra.mxu0 0.0
    %126 = vmatprep.subr.mxu0 0.0
    %127 = vmatpush1.msra.mxu0 0.0
    %128 = vmatprep.subr.mxu0 0.0
    %129 = vmatpush1.msra.mxu0 0.0
    %130 = vmatprep.mubr.f32.mxu0 0.0
    %131 = vmatmul.mubr.f32.gmra.mrb[0].mxu0 %v64
    %v132 = vpop.f32.mrb[0].mxu0
    %v133 = vadd.f32 0.0, %v132
    %v134 = vpop.f32.mrb[0].mxu0
    %135 = vdwg.mxu0
    %vm136 = vcmask 130048
    %v138 = vsel %vm136, %v41, 0
    %140 = vmatprep.subr.mxu0 0.0
    %141 = vmatpush1.msra.mxu0 %v43
    %142 = vmatprep.subr.mxu0 0.0
    %143 = vmatpush1.msra.mxu0 %v44
    %144 = vmatprep.subr.mxu0 0.0
    %145 = vmatpush1.msra.mxu0 0.0
    %146 = vmatprep.subr.mxu0 0.0
    %147 = vmatpush1.msra.mxu0 0.0
    %148 = vmatprep.subr.mxu0 0.0
    %149 = vmatpush1.msra.mxu0 0.0
    %150 = vmatprep.subr.mxu0 0.0
    %151 = vmatpush1.msra.mxu0 0.0
    %152 = vmatprep.subr.mxu0 0.0
    %153 = vmatpush1.msra.mxu0 0.0
    %154 = vmatprep.subr.mxu0 0.0
    %155 = vmatpush1.msra.mxu0 0.0
    %156 = vmatprep.subr.mxu0 0.0
    %157 = vmatpush1.msra.mxu0 0.0
    %158 = vmatprep.subr.mxu0 0.0
    %159 = vmatpush1.msra.mxu0 0.0
    %160 = vmatprep.subr.mxu0 0.0
    %161 = vmatpush1.msra.mxu0 0.0
    %162 = vmatprep.subr.mxu0 0.0
    %163 = vmatpush1.msra.mxu0 0.0
    %164 = vmatprep.subr.mxu0 0.0
    %165 = vmatpush1.msra.mxu0 0.0
    %166 = vmatprep.subr.mxu0 0.0
    %167 = vmatpush1.msra.mxu0 0.0
    %168 = vmatprep.subr.mxu0 0.0
    %169 = vmatpush1.msra.mxu0 0.0
    %170 = vmatprep.subr.mxu0 0.0
    %171 = vmatpush1.msra.mxu0 0.0
    %172 = vmatprep.subr.mxu0 0.0
    %173 = vmatpush1.msra.mxu0 0.0
    %174 = vmatprep.subr.mxu0 0.0
    %175 = vmatpush1.msra.mxu0 0.0
    %176 = vmatprep.subr.mxu0 0.0
    %177 = vmatpush1.msra.mxu0 0.0
    %178 = vmatprep.subr.mxu0 0.0
    %179 = vmatpush1.msra.mxu0 0.0
    %180 = vmatprep.subr.mxu0 0.0
    %181 = vmatpush1.msra.mxu0 0.0
    %182 = vmatprep.subr.mxu0 0.0
    %183 = vmatpush1.msra.mxu0 0.0
    %184 = vmatprep.subr.mxu0 0.0
    %185 = vmatpush1.msra.mxu0 0.0
    %186 = vmatprep.subr.mxu0 0.0
    %187 = vmatpush1.msra.mxu0 0.0
    %188 = vmatprep.subr.mxu0 0.0
    %189 = vmatpush1.msra.mxu0 0.0
    %190 = vmatprep.subr.mxu0 0.0
    %191 = vmatpush1.msra.mxu0 0.0
    %192 = vmatprep.subr.mxu0 0.0
    %193 = vmatpush1.msra.mxu0 0.0
    %194 = vmatprep.subr.mxu0 0.0
    %195 = vmatpush1.msra.mxu0 0.0
    %196 = vmatprep.subr.mxu0 0.0
    %197 = vmatpush1.msra.mxu0 0.0
    %198 = vmatprep.subr.mxu0 0.0
    %199 = vmatpush1.msra.mxu0 0.0
    %200 = vmatprep.subr.mxu0 0.0
    %201 = vmatpush1.msra.mxu0 0.0
    %202 = vmatprep.subr.mxu0 0.0
    %203 = vmatpush1.msra.mxu0 0.0
    %204 = vmatprep.mubr.f32.mxu0 0.0
    %205 = vmatmul.mubr.f32.gmra.mrb[0].mxu0 %v138
    %v206 = vpop.f32.mrb[0].mxu0
    %v207 = vadd.f32 %v133, %v206
    %v208 = vpop.f32.mrb[0].mxu0
    %209 = vdwg.mxu0
    %v210 = vlaneseq
    %v211 = vshrl.u32 %v210, 7
    %v212 = vsub.s32 0, %v211
    %v213 = vrot.slane %v61, %v212
    %v214 = vadd.f32 %v207, %v213
    %v215 = vxor.u32 %v214, 2147483648
    %v216 = vmul.f32 %v215, 1.442695
    %v217 = vpow.pop %v216
    %v218 = vadd.f32 %v217, 1.0
    %v219 = vrcp.pop %v218
    %v220 = vmul.f32 1.0, %v219
    %v221 = vtanh.pop %v214
    %v222 = vmul.f32 %v220, %v42
    %224 = vrot.lane.b32.xlu0 %v221, 64
    %v225 = vpop.permute.xlu0 %224
    %v227 = vmul.f32 %v220, %v225
    %229 = vrot.lane.b32.xlu0 %v227, 32
    %v230 = vpop.permute.xlu0 %229
    %v232 = vadd.f32 %v222, %v230
    %v233 = vtanh.pop %v232
    %235 = vrot.lane.b32.xlu0 %v233, 64
    %v236 = vpop.permute.xlu0 %235
    %v238 = vmul.f32 %v220, %v236
    %v240 = vunpack.c.l.s4 1983009808
    %v241 = vunpack.c.0.s8 %v240
    %v242 = vlaneseq
    %v243 = vshrl.u32 %v242, 7
    %v244 = vsub.s32 %v241, %v243
    %v245 = vrot.slane %v42, %v244
    %246 = vrot.lane.b32.xlu0 %v245, 64
    %v247 = vpop.permute.xlu0 %246
    %v248 = vsel %vm62, %v247, 0
    %250 = vmatprep.subr.mxu0 0.0
    %251 = vmatpush1.msra.mxu0 %v53
    %252 = vmatprep.subr.mxu0 0.0
    %253 = vmatpush1.msra.mxu0 %v54
    %254 = vmatprep.subr.mxu0 0.0
    %255 = vmatpush1.msra.mxu0 %v55
    %256 = vmatprep.subr.mxu0 0.0
    %257 = vmatpush1.msra.mxu0 %v56
    %258 = vmatprep.subr.mxu0 0.0
    %259 = vmatpush1.msra.mxu0 0.0
    %260 = vmatprep.subr.mxu0 0.0
    %261 = vmatpush1.msra.mxu0 0.0
    %262 = vmatprep.subr.mxu0 0.0
    %263 = vmatpush1.msra.mxu0 0.0
    %264 = vmatprep.subr.mxu0 0.0
    %265 = vmatpush1.msra.mxu0 0.0
    %266 = vmatprep.subr.mxu0 0.0
    %267 = vmatpush1.msra.mxu0 0.0
    %268 = vmatprep.subr.mxu0 0.0
    %269 = vmatpush1.msra.mxu0 0.0
    %270 = vmatprep.subr.mxu0 0.0
    %271 = vmatpush1.msra.mxu0 0.0
    %272 = vmatprep.subr.mxu0 0.0
    %273 = vmatpush1.msra.mxu0 0.0
    %274 = vmatprep.subr.mxu0 0.0
    %275 = vmatpush1.msra.mxu0 0.0
    %276 = vmatprep.subr.mxu0 0.0
    %277 = vmatpush1.msra.mxu0 0.0
    %278 = vmatprep.subr.mxu0 0.0
    %279 = vmatpush1.msra.mxu0 0.0
    %280 = vmatprep.subr.mxu0 0.0
    %281 = vmatpush1.msra.mxu0 0.0
    %282 = vmatprep.subr.mxu0 0.0
    %283 = vmatpush1.msra.mxu0 0.0
    %284 = vmatprep.subr.mxu0 0.0
    %285 = vmatpush1.msra.mxu0 0.0
    %286 = vmatprep.subr.mxu0 0.0
    %287 = vmatpush1.msra.mxu0 0.0
    %288 = vmatprep.subr.mxu0 0.0
    %289 = vmatpush1.msra.mxu0 0.0
    %290 = vmatprep.subr.mxu0 0.0
    %291 = vmatpush1.msra.mxu0 0.0
    %292 = vmatprep.subr.mxu0 0.0
    %293 = vmatpush1.msra.mxu0 0.0
    %294 = vmatprep.subr.mxu0 0.0
    %295 = vmatpush1.msra.mxu0 0.0
    %296 = vmatprep.subr.mxu0 0.0
    %297 = vmatpush1.msra.mxu0 0.0
    %298 = vmatprep.subr.mxu0 0.0
    %299 = vmatpush1.msra.mxu0 0.0
    %300 = vmatprep.subr.mxu0 0.0
    %301 = vmatpush1.msra.mxu0 0.0
    %302 = vmatprep.subr.mxu0 0.0
    %303 = vmatpush1.msra.mxu0 0.0
    %304 = vmatprep.subr.mxu0 0.0
    %305 = vmatpush1.msra.mxu0 0.0
    %306 = vmatprep.subr.mxu0 0.0
    %307 = vmatpush1.msra.mxu0 0.0
    %308 = vmatprep.subr.mxu0 0.0
    %309 = vmatpush1.msra.mxu0 0.0
    %310 = vmatprep.subr.mxu0 0.0
    %311 = vmatpush1.msra.mxu0 0.0
    %312 = vmatprep.subr.mxu0 0.0
    %313 = vmatpush1.msra.mxu0 0.0
    %314 = vmatprep.mubr.f32.mxu0 0.0
    %315 = vmatmul.mubr.f32.gmra.mrb[0].mxu0 %v248
    %v316 = vpop.f32.mrb[0].mxu0
    %v317 = vadd.f32 0.0, %v316
    %v318 = vpop.f32.mrb[0].mxu0
    %319 = vdwg.mxu0
    %321 = vrot.lane.b32.xlu0 %v238, 32
    %v322 = vpop.permute.xlu0 %321
    %v323 = vsel %vm62, %v322, 0
    %325 = vmatprep.subr.mxu0 0.0
    %326 = vmatpush1.msra.mxu0 %v49
    %327 = vmatprep.subr.mxu0 0.0
    %328 = vmatpush1.msra.mxu0 %v50
    %329 = vmatprep.subr.mxu0 0.0
    %330 = vmatpush1.msra.mxu0 %v51
    %331 = vmatprep.subr.mxu0 0.0
    %332 = vmatpush1.msra.mxu0 %v52
    %333 = vmatprep.subr.mxu0 0.0
    %334 = vmatpush1.msra.mxu0 0.0
    %335 = vmatprep.subr.mxu0 0.0
    %336 = vmatpush1.msra.mxu0 0.0
    %337 = vmatprep.subr.mxu0 0.0
    %338 = vmatpush1.msra.mxu0 0.0
    %339 = vmatprep.subr.mxu0 0.0
    %340 = vmatpush1.msra.mxu0 0.0
    %341 = vmatprep.subr.mxu0 0.0
    %342 = vmatpush1.msra.mxu0 0.0
    %343 = vmatprep.subr.mxu0 0.0
    %344 = vmatpush1.msra.mxu0 0.0
    %345 = vmatprep.subr.mxu0 0.0
    %346 = vmatpush1.msra.mxu0 0.0
    %347 = vmatprep.subr.mxu0 0.0
    %348 = vmatpush1.msra.mxu0 0.0
    %349 = vmatprep.subr.mxu0 0.0
    %350 = vmatpush1.msra.mxu0 0.0
    %351 = vmatprep.subr.mxu0 0.0
    %352 = vmatpush1.msra.mxu0 0.0
    %353 = vmatprep.subr.mxu0 0.0
    %354 = vmatpush1.msra.mxu0 0.0
    %355 = vmatprep.subr.mxu0 0.0
    %356 = vmatpush1.msra.mxu0 0.0
    %357 = vmatprep.subr.mxu0 0.0
    %358 = vmatpush1.msra.mxu0 0.0
    %359 = vmatprep.subr.mxu0 0.0
    %360 = vmatpush1.msra.mxu0 0.0
    %361 = vmatprep.subr.mxu0 0.0
    %362 = vmatpush1.msra.mxu0 0.0
    %363 = vmatprep.subr.mxu0 0.0
    %364 = vmatpush1.msra.mxu0 0.0
    %365 = vmatprep.subr.mxu0 0.0
    %366 = vmatpush1.msra.mxu0 0.0
    %367 = vmatprep.subr.mxu0 0.0
    %368 = vmatpush1.msra.mxu0 0.0
    %369 = vmatprep.subr.mxu0 0.0
    %370 = vmatpush1.msra.mxu0 0.0
    %371 = vmatprep.subr.mxu0 0.0
    %372 = vmatpush1.msra.mxu0 0.0
    %373 = vmatprep.subr.mxu0 0.0
    %374 = vmatpush1.msra.mxu0 0.0
    %375 = vmatprep.subr.mxu0 0.0
    %376 = vmatpush1.msra.mxu0 0.0
    %377 = vmatprep.subr.mxu0 0.0
    %378 = vmatpush1.msra.mxu0 0.0
    %379 = vmatprep.subr.mxu0 0.0
    %380 = vmatpush1.msra.mxu0 0.0
    %381 = vmatprep.subr.mxu0 0.0
    %382 = vmatpush1.msra.mxu0 0.0
    %383 = vmatprep.subr.mxu0 0.0
    %384 = vmatpush1.msra.mxu0 0.0
    %385 = vmatprep.subr.mxu0 0.0
    %386 = vmatpush1.msra.mxu0 0.0
    %387 = vmatprep.subr.mxu0 0.0
    %388 = vmatpush1.msra.mxu0 0.0
    %389 = vmatprep.mubr.f32.mxu0 0.0
    %390 = vmatmul.mubr.f32.gmra.mrb[0].mxu0 %v323
    %v391 = vpop.f32.mrb[0].mxu0
    %v392 = vadd.f32 %v317, %v391
    %v393 = vpop.f32.mrb[0].mxu0
    %394 = vdwg.mxu0
    %v395 = vlaneseq
    %v396 = vshrl.u32 %v395, 7
    %v397 = vsub.s32 1, %v396
    %v398 = vrot.slane %v61, %v397
    %v399 = vadd.f32 %v392, %v398
    %v400 = vxor.u32 %v399, 2147483648
    %v401 = vmul.f32 %v400, 1.442695
    %v402 = vpow.pop %v401
    %v403 = vadd.f32 %v402, 1.0
    %v404 = vrcp.pop %v403
    %v405 = vmul.f32 1.0, %v404
    %v406 = vtanh.pop %v399
    %v408 = vmul.f32 %v405, %v247
    %410 = vrot.lane.b32.xlu0 %v406, 64
    %v411 = vpop.permute.xlu0 %410
    %v413 = vmul.f32 %v405, %v411
    %415 = vrot.lane.b32.xlu0 %v413, 32
    %v416 = vpop.permute.xlu0 %415
    %v418 = vadd.f32 %v408, %v416
    %v419 = vtanh.pop %v418
    %421 = vrot.lane.b32.xlu0 %v419, 64
    %v422 = vpop.permute.xlu0 %421
    %v424 = vmul.f32 %v405, %v422
    %v425 = vlaneseq
    %v426 = vshrl.u32 %v425, 7
    %v427 = vsub.s32 2, %v426
    %v428 = vrot.slane %v61, %v427
    %430 = vrot.lane.b32.xlu0 %v424, 32
    %v431 = vpop.permute.xlu0 %430
    %v432 = vsel %vm62, %v431, 0
    %434 = vmatprep.subr.mxu0 0.0
    %435 = vmatpush1.msra.mxu0 %v57
    %436 = vmatprep.subr.mxu0 0.0
    %437 = vmatpush1.msra.mxu0 %v58
    %438 = vmatprep.subr.mxu0 0.0
    %439 = vmatpush1.msra.mxu0 %v59
    %440 = vmatprep.subr.mxu0 0.0
    %441 = vmatpush1.msra.mxu0 %v60
    %442 = vmatprep.subr.mxu0 0.0
    %443 = vmatpush1.msra.mxu0 0.0
    %444 = vmatprep.subr.mxu0 0.0
    %445 = vmatpush1.msra.mxu0 0.0
    %446 = vmatprep.subr.mxu0 0.0
    %447 = vmatpush1.msra.mxu0 0.0
    %448 = vmatprep.subr.mxu0 0.0
    %449 = vmatpush1.msra.mxu0 0.0
    %450 = vmatprep.subr.mxu0 0.0
    %451 = vmatpush1.msra.mxu0 0.0
    %452 = vmatprep.subr.mxu0 0.0
    %453 = vmatpush1.msra.mxu0 0.0
    %454 = vmatprep.subr.mxu0 0.0
    %455 = vmatpush1.msra.mxu0 0.0
    %456 = vmatprep.subr.mxu0 0.0
    %457 = vmatpush1.msra.mxu0 0.0
    %458 = vmatprep.subr.mxu0 0.0
    %459 = vmatpush1.msra.mxu0 0.0
    %460 = vmatprep.subr.mxu0 0.0
    %461 = vmatpush1.msra.mxu0 0.0
    %462 = vmatprep.subr.mxu0 0.0
    %463 = vmatpush1.msra.mxu0 0.0
    %464 = vmatprep.subr.mxu0 0.0
    %465 = vmatpush1.msra.mxu0 0.0
    %466 = vmatprep.subr.mxu0 0.0
    %467 = vmatpush1.msra.mxu0 0.0
    %468 = vmatprep.subr.mxu0 0.0
    %469 = vmatpush1.msra.mxu0 0.0
    %470 = vmatprep.subr.mxu0 0.0
    %471 = vmatpush1.msra.mxu0 0.0
    %472 = vmatprep.subr.mxu0 0.0
    %473 = vmatpush1.msra.mxu0 0.0
    %474 = vmatprep.subr.mxu0 0.0
    %475 = vmatpush1.msra.mxu0 0.0
    %476 = vmatprep.subr.mxu0 0.0
    %477 = vmatpush1.msra.mxu0 0.0
    %478 = vmatprep.subr.mxu0 0.0
    %479 = vmatpush1.msra.mxu0 0.0
    %480 = vmatprep.subr.mxu0 0.0
    %481 = vmatpush1.msra.mxu0 0.0
    %482 = vmatprep.subr.mxu0 0.0
    %483 = vmatpush1.msra.mxu0 0.0
    %484 = vmatprep.subr.mxu0 0.0
    %485 = vmatpush1.msra.mxu0 0.0
    %486 = vmatprep.subr.mxu0 0.0
    %487 = vmatpush1.msra.mxu0 0.0
    %488 = vmatprep.subr.mxu0 0.0
    %489 = vmatpush1.msra.mxu0 0.0
    %490 = vmatprep.subr.mxu0 0.0
    %491 = vmatpush1.msra.mxu0 0.0
    %492 = vmatprep.subr.mxu0 0.0
    %493 = vmatpush1.msra.mxu0 0.0
    %494 = vmatprep.subr.mxu0 0.0
    %495 = vmatpush1.msra.mxu0 0.0
    %496 = vmatprep.subr.mxu0 0.0
    %497 = vmatpush1.msra.mxu0 0.0
    %498 = vmatprep.mubr.f32.mxu0 0.0
    %499 = vmatmul.mubr.f32.gmra.mrb[0].mxu0 %v432
    %v500 = vpop.f32.mrb[0].mxu0
    %v501 = vadd.f32 %v428, %v500
    %v502 = vpop.f32.mrb[0].mxu0
    %503 = vdwg.mxu0
    %504 = vst [vmem:[#allocation7] sm:$0x3] %v501
    %506 = vrot.lane.b32.xlu0 %v424, 96
    %v507 = vpop.permute.xlu0 %506
    %510 = vrot.lane.b32.xlu0 %v418, 64
    %v511 = vpop.permute.xlu0 %510
    %v513 = vsel %vm62, %v322, %v232
    %vm514 = vcmask 523264
    %v515 = vsel %vm514, %v513, %v507
    %vm516 = vcmask 785408
    %v517 = vsel %vm516, %v515, %v511
    %518 = vst [vmem:[#allocation7 + $0x2] sm:$0x3] %v517
    // Predicated region
    $region22: #{tpu_custom_call.1} parent=1 // pred_check
      _
    $region23: #{tpu_custom_call.1} parent=1 // pred_check_branch
      %520 = sbr.rel (0) target = $region25
    $region24: #{tpu_custom_call.1} parent=1 // pred_region
      %s522 = ssub.s32 64, 64
      %523 = vsyncadd [#allocation4], %s522
      %s525 = sshll.u32 [#allocation7], 4
      %s526 = int_to_ptr.vmem [resolvable:$true] %s525
      %528 = dma.vmem_to_hbm [thread:$0]  %s526, 64, %s3, [#allocation4]
    $region25: #{tpu_custom_call.1} parent=1 // pred_fallthru
      _
    // Predicated region
    $region26: #{tpu_custom_call.1} parent=1 // pred_check
      _
    $region27: #{tpu_custom_call.1} parent=1 // pred_check_branch
      %530 = sbr.rel (0) target = $region29
    $region28: #{tpu_custom_call.1} parent=1 // pred_region
      %531 = dma.done [#allocation4], 64
    $region29: #{tpu_custom_call.1} parent=1 // pred_fallthru
      _
    %532 = vsyncpa [#allocation3], 1
    %533 = vsyncpa [#allocation6], 1
    %534 = vsyncpa [#allocation4], 1

</llo_original>
